<compile_context>
chip_gen: v7x
topology: tpu7x:2x2x1
jax: 0.10.0
libtpu: 0.0.40
codegen_flags: <defaults>
</compile_context>

<pallas_src>
import jax
import jax.numpy as jnp
from jax.experimental import pallas as pl
from jax.experimental.pallas import tpu as pltpu


def ljp_predictor_kernel(h_ref, w1_ref, b1_ref, w2_ref, b2_ref, w3_ref, b3_ref,
                         out_ref, acc_ref):
    """One (batch-block i, K-block k) step of the 3-layer LJP head."""
    k = pl.program_id(1)

    @pl.when(k == 0)
    def _init():
        acc_ref[...] = jnp.zeros_like(acc_ref)

    # Layer 1 partial: x1_k = h @ W1[:, kK:(k+1)K] + b1[kK:(k+1)K]   (TB, TK) f32
    x1 = jnp.dot(h_ref[...], w1_ref[...], preferred_element_type=jnp.float32)
    x1 = x1 + b1_ref[...]

    # Layer 2 accumulation: acc += x1_k @ W2[kK:(k+1)K, :]           (TB, H) f32
    acc_ref[...] += jnp.dot(x1.astype(w2_ref.dtype), w2_ref[...],
                            preferred_element_type=jnp.float32)

    # Finalize: layer-2 bias, then N=1 projection as VPU mul + lane reduction.
    @pl.when(k == pl.num_programs(1) - 1)
    def _finalize():
        x2 = acc_ref[...] + b2_ref[...]
        money = jnp.sum(x2 * w3_ref[...], axis=-1, keepdims=True) + b3_ref[...]
        out_ref[...] = money.astype(out_ref.dtype)


def prepare_params(params, weight_dtype=jnp.bfloat16):
    """One-time parameter preprocessing (call once, reuse every forward).

    Transposes nn.Linear weights (out,in) -> (in,out), casts the two (H,H)
    weights to the streaming dtype, reshapes biases to broadcastable rows and
    the final layer to a (1,H) lane row.
    """
    w1, b1, w2, b2, w3, b3 = params
    H = w1.shape[0]
    return dict(
        w1_t=w1.T.astype(weight_dtype),               # (H, H)
        b1_r=b1.reshape(1, H).astype(jnp.float32),    # (1, H)
        w2_t=w2.T.astype(weight_dtype),               # (H, H)
        b2_r=b2.reshape(1, H).astype(jnp.float32),    # (1, H)
        w3_r=w3.reshape(1, H).astype(jnp.float32),    # (1, H)  final proj as a row
        b3_r=b3.reshape(1, 1).astype(jnp.float32),    # (1, 1)
        weight_dtype=weight_dtype,
    )


def _choose_tiles(B, H, w_bytes):
    """Pick (batch tile, K tile) so the double-buffered working set fits VMEM."""
    def pick(total, cands):
        for c in cands:
            if c <= total and total % c == 0:
                return c
        return total

    TB = pick(B, (256, 128, 64, 32, 16, 8))
    TK = pick(H, (1024, 512, 256, 128))

    def vmem_bytes(tb, tk):
        slabs = 2 * 2 * H * tk * w_bytes        # W1 col-slab + W2 row-slab, double-buffered
        hbuf = 2 * tb * H * w_bytes             # h block (double-buffered)
        acc = tb * H * 4                        # f32 accumulator scratch
        small = (tk + 3 * H + 2) * 4 + 2 * tb * 4
        return slabs + hbuf + acc + small

    budget = 22 * 1024 * 1024                   # comfortably under the 32 MiB scoped limit
    while vmem_bytes(TB, TK) > budget and TK % 256 == 0:
        TK //= 2
    while vmem_bytes(TB, TK) > budget and TB % 16 == 0:
        TB //= 2
    return TB, TK


def ljp_predictor_forward(h, prepared):
    """Returns {'money': (batch,) array}, matching the PyTorch module."""
    B, H = h.shape
    w_dtype = prepared['weight_dtype']
    w_bytes = jnp.dtype(w_dtype).itemsize
    TB, TK = _choose_tiles(B, H, w_bytes)
    grid = (B // TB, H // TK)

    cost = pl.CostEstimate(
        flops=4 * B * H * H + 4 * B * H,
        transcendentals=0,
        bytes_accessed=2 * H * H * w_bytes + B * H * w_bytes + (3 * H + 1) * 4 + B * 4,
    )

    money_2d = pl.pallas_call(
        ljp_predictor_kernel,
        out_shape=jax.ShapeDtypeStruct((B, 1), jnp.float32),
        grid_spec=pltpu.PrefetchScalarGridSpec(
            num_scalar_prefetch=0,
            grid=grid,
            in_specs=[
                pl.BlockSpec((TB, H), lambda i, k: (i, 0)),   # h (resident across k)
                pl.BlockSpec((H, TK), lambda i, k: (0, k)),   # W1 column slab (streamed)
                pl.BlockSpec((1, TK), lambda i, k: (0, k)),   # b1 slab
                pl.BlockSpec((TK, H), lambda i, k: (k, 0)),   # W2 row slab (streamed)
                pl.BlockSpec((1, H), lambda i, k: (0, 0)),    # b2
                pl.BlockSpec((1, H), lambda i, k: (0, 0)),    # w3 row
                pl.BlockSpec((1, 1), lambda i, k: (0, 0)),    # b3
            ],
            out_specs=pl.BlockSpec((TB, 1), lambda i, k: (i, 0)),
            scratch_shapes=[pltpu.VMEM((TB, H), jnp.float32)],
        ),
        compiler_params=pltpu.CompilerParams(
            dimension_semantics=("parallel", "arbitrary"),
            vmem_limit_bytes=32 * 1024 * 1024,
        ),
        cost_estimate=cost,
    )(
        h.astype(w_dtype),
        prepared['w1_t'], prepared['b1_r'],
        prepared['w2_t'], prepared['b2_r'],
        prepared['w3_r'], prepared['b3_r'],
    )

    # Glue: money.view(batch)
    return {'money': money_2d.reshape(B)}


def init_params(key, hidden_size):
    """Deterministic synthetic params mirroring the nn.Linear shapes."""
    k1, k2, k3, k4, k5, k6 = jax.random.split(key, 6)
    scale = 1.0 / jnp.sqrt(hidden_size)
    w1 = jax.random.uniform(k1, (hidden_size, hidden_size), jnp.float32, -scale, scale)
    b1 = jax.random.uniform(k2, (hidden_size,), jnp.float32, -scale, scale)
    w2 = jax.random.uniform(k3, (hidden_size, hidden_size), jnp.float32, -scale, scale)
    b2 = jax.random.uniform(k4, (hidden_size,), jnp.float32, -scale, scale)
    w3 = jax.random.uniform(k5, (1, hidden_size), jnp.float32, -scale, scale)
    b3 = jax.random.uniform(k6, (1,), jnp.float32, -scale, scale)
    return (w1, b1, w2, b2, w3, b3)


if __name__ == "__main__":
    batch = 2          # NOTE: real deployments should pad/batch B >= 8 (ideally 128+)
    hidden_size = 32

    key = jax.random.PRNGKey(0)
    k_h, k_p = jax.random.split(key)
    h = jax.random.normal(k_h, (batch, hidden_size), dtype=jnp.float32)
    params = init_params(k_p, hidden_size)

    prepared = prepare_params(params, weight_dtype=jnp.bfloat16)   # one-time preprocessing
    out = ljp_predictor_forward(h, prepared)
    money = jax.block_until_ready(out['money'])
    assert money.shape == (batch,)

    w1, b1, w2, b2, w3, b3 = params
    f32 = jnp.float32

    # Reference 1: mirror the kernel's bf16 casts exactly (tight tolerance).
    h_q = h.astype(jnp.bfloat16).astype(f32)
    w1_q = w1.T.astype(jnp.bfloat16).astype(f32)
    w2_q = w2.T.astype(jnp.bfloat16).astype(f32)
    x1 = (h_q @ w1_q + b1).astype(jnp.bfloat16).astype(f32)
    x2 = x1 @ w2_q + b2
    ref_mirror = (x2 * w3.reshape(1, -1)).sum(-1) + b3[0]
    assert jnp.allclose(money, ref_mirror, atol=1e-3, rtol=1e-3)

    # Reference 2: original f32 module math (loose tolerance for bf16 weights).
    ref_f32 = (((h @ w1.T + b1) @ w2.T + b2) @ w3.T + b3).reshape(batch)
    assert jnp.allclose(money, ref_f32, atol=5e-2, rtol=5e-2)

    print("KERNEL_OK")
</pallas_src>

<mosaic_0001>
module attributes {stable_mosaic.version = 11 : i64} {
  func.func @ljp_predictor_kernel(%arg0: i32, %arg1: i32, %arg2: memref<2x32xbf16, #tpu.memory_space<vmem>>, %arg3: memref<32x32xbf16, #tpu.memory_space<vmem>>, %arg4: memref<1x32xf32, #tpu.memory_space<vmem>>, %arg5: memref<32x32xbf16, #tpu.memory_space<vmem>>, %arg6: memref<1x32xf32, #tpu.memory_space<vmem>>, %arg7: memref<1x32xf32, #tpu.memory_space<vmem>>, %arg8: memref<1x1xf32, #tpu.memory_space<vmem>>, %arg9: memref<2x1xf32, #tpu.memory_space<vmem>>, %arg10: memref<2x32xf32, #tpu.memory_space<vmem>>) attributes {dimension_semantics = [#tpu.dimension_semantics<parallel>, #tpu.dimension_semantics<arbitrary>], iteration_bounds = array<i64: 1, 1>, scalar_prefetch = 0 : i64, scratch_operands = 1 : i64, tpu.core_type = #tpu.core_type<tc>, window_params = [{transform_indices = @transform_0, window_bounds = array<i64: 2, 32>}, {transform_indices = @transform_1, window_bounds = array<i64: 32, 32>}, {transform_indices = @transform_2, window_bounds = array<i64: 1, 32>}, {transform_indices = @transform_3, window_bounds = array<i64: 32, 32>}, {pipeline_mode = #tpu.pipeline_mode<synchronous>, transform_indices = @transform_4, window_bounds = array<i64: 1, 32>}, {pipeline_mode = #tpu.pipeline_mode<synchronous>, transform_indices = @transform_5, window_bounds = array<i64: 1, 32>}, {pipeline_mode = #tpu.pipeline_mode<synchronous>, transform_indices = @transform_6, window_bounds = array<i64: 1, 1>}, {transform_indices = @transform_7, window_bounds = array<i64: 2, 1>}]} {
    %c0_i32 = arith.constant 0 : i32
    %0 = arith.cmpi eq, %arg1, %c0_i32 : i32
    %1 = arith.extui %0 : i1 to i32
    %c0_i32_0 = arith.constant 0 : i32
    %2 = arith.cmpi ne, %1, %c0_i32_0 : i32
    scf.if %2 {
      %cst_15 = arith.constant 0.000000e+00 : f32
      %18 = vector.broadcast %cst_15 : f32 to vector<2x32xf32>
      %c0_16 = arith.constant 0 : index
      %c0_17 = arith.constant 0 : index
      %19 = vector.load %arg10[%c0_16, %c0_17] : memref<2x32xf32, #tpu.memory_space<vmem>>, vector<2x32xf32>
      tpu.vector_store %arg10[%c0_16, %c0_17], %18 {strides = array<i32>} : memref<2x32xf32, #tpu.memory_space<vmem>>, vector<2x32xf32>,
    } else {
    }
    %c0 = arith.constant 0 : index
    %c0_1 = arith.constant 0 : index
    %3 = vector.load %arg2[%c0, %c0_1] : memref<2x32xbf16, #tpu.memory_space<vmem>>, vector<2x32xbf16>
    %c0_2 = arith.constant 0 : index
    %c0_3 = arith.constant 0 : index
    %4 = vector.load %arg3[%c0_2, %c0_3] : memref<32x32xbf16, #tpu.memory_space<vmem>>, vector<32x32xbf16>
    %cst = arith.constant dense<0.000000e+00> : vector<2x32xf32>
    %5 = tpu.matmul %3, %4, %cst {dimension_numbers = #tpu.dot_dimension_numbers<[1], [0], [0], [1], [0, 0, 1, 1], [], []>} : vector<2x32xbf16>, vector<32x32xbf16>, vector<2x32xf32> -> vector<2x32xf32>
    %c0_4 = arith.constant 0 : index
    %c0_5 = arith.constant 0 : index
    %6 = vector.load %arg4[%c0_4, %c0_5] : memref<1x32xf32, #tpu.memory_space<vmem>>, vector<1x32xf32>
    %7 = vector.broadcast %6 : vector<1x32xf32> to vector<2x32xf32>
    %8 = arith.addf %5, %7 : vector<2x32xf32>
    %c0_6 = arith.constant 0 : index
    %c0_7 = arith.constant 0 : index
    %9 = vector.load %arg10[%c0_6, %c0_7] : memref<2x32xf32, #tpu.memory_space<vmem>>, vector<2x32xf32>
    %10 = arith.truncf %8 : vector<2x32xf32> to vector<2x32xbf16>
    %c0_8 = arith.constant 0 : index
    %c0_9 = arith.constant 0 : index
    %11 = vector.load %arg5[%c0_8, %c0_9] : memref<32x32xbf16, #tpu.memory_space<vmem>>, vector<32x32xbf16>
    %cst_10 = arith.constant dense<0.000000e+00> : vector<2x32xf32>
    %12 = tpu.matmul %10, %11, %cst_10 {dimension_numbers = #tpu.dot_dimension_numbers<[1], [0], [0], [1], [0, 0, 1, 1], [], []>} : vector<2x32xbf16>, vector<32x32xbf16>, vector<2x32xf32> -> vector<2x32xf32>
    %13 = arith.addf %9, %12 : vector<2x32xf32>
    %c0_11 = arith.constant 0 : index
    %c0_12 = arith.constant 0 : index
    %14 = vector.load %arg10[%c0_11, %c0_12] : memref<2x32xf32, #tpu.memory_space<vmem>>, vector<2x32xf32>
    tpu.vector_store %arg10[%c0_11, %c0_12], %13 {strides = array<i32>} : memref<2x32xf32, #tpu.memory_space<vmem>>, vector<2x32xf32>,
    %c0_i32_13 = arith.constant 0 : i32
    %15 = arith.cmpi eq, %arg1, %c0_i32_13 : i32
    %16 = arith.extui %15 : i1 to i32
    %c0_i32_14 = arith.constant 0 : i32
    %17 = arith.cmpi ne, %16, %c0_i32_14 : i32
    scf.if %17 {
      %c0_15 = arith.constant 0 : index
      %c0_16 = arith.constant 0 : index
      %18 = vector.load %arg10[%c0_15, %c0_16] : memref<2x32xf32, #tpu.memory_space<vmem>>, vector<2x32xf32>
      %c0_17 = arith.constant 0 : index
      %c0_18 = arith.constant 0 : index
      %19 = vector.load %arg6[%c0_17, %c0_18] : memref<1x32xf32, #tpu.memory_space<vmem>>, vector<1x32xf32>
      %20 = vector.broadcast %19 : vector<1x32xf32> to vector<2x32xf32>
      %21 = arith.addf %18, %20 : vector<2x32xf32>
      %c0_19 = arith.constant 0 : index
      %c0_20 = arith.constant 0 : index
      %22 = vector.load %arg7[%c0_19, %c0_20] : memref<1x32xf32, #tpu.memory_space<vmem>>, vector<1x32xf32>
      %23 = vector.broadcast %22 : vector<1x32xf32> to vector<2x32xf32>
      %24 = arith.mulf %21, %23 : vector<2x32xf32>
      %cst_21 = arith.constant dense<0.000000e+00> : vector<2xf32>
      %25 = vector.multi_reduction <add>, %24, %cst_21 [1] : vector<2x32xf32> to vector<2xf32>
      %26 = vector.shape_cast %25 : vector<2xf32> to vector<2x1xf32>
      %c0_22 = arith.constant 0 : index
      %c0_23 = arith.constant 0 : index
      %27 = vector.load %arg8[%c0_22, %c0_23] : memref<1x1xf32, #tpu.memory_space<vmem>>, vector<1x1xf32>
      %28 = vector.broadcast %27 : vector<1x1xf32> to vector<2x1xf32>
      %29 = arith.addf %26, %28 : vector<2x1xf32>
      %c0_24 = arith.constant 0 : index
      %c0_25 = arith.constant 0 : index
      %30 = vector.load %arg9[%c0_24, %c0_25] : memref<2x1xf32, #tpu.memory_space<vmem>>, vector<2x1xf32>
      tpu.vector_store %arg9[%c0_24, %c0_25], %29 {strides = array<i32>} : memref<2x1xf32, #tpu.memory_space<vmem>>, vector<2x1xf32>,
    } else {
    }
    return
  }
  func.func @transform_0(%arg0: i32, %arg1: i32) -> (i32, i32) {
    %c0_i32 = arith.constant 0 : i32
    %c0_i32_0 = arith.constant 0 : i32
    return %arg0, %c0_i32 : i32, i32
  }
  func.func @transform_1(%arg0: i32, %arg1: i32) -> (i32, i32) {
    %c0_i32 = arith.constant 0 : i32
    %c0_i32_0 = arith.constant 0 : i32
    return %c0_i32, %arg1 : i32, i32
  }
  func.func @transform_2(%arg0: i32, %arg1: i32) -> (i32, i32) {
    %c0_i32 = arith.constant 0 : i32
    %c0_i32_0 = arith.constant 0 : i32
    return %c0_i32, %arg1 : i32, i32
  }
  func.func @transform_3(%arg0: i32, %arg1: i32) -> (i32, i32) {
    %c0_i32 = arith.constant 0 : i32
    %c0_i32_0 = arith.constant 0 : i32
    return %arg1, %c0_i32 : i32, i32
  }
  func.func @transform_4(%arg0: i32, %arg1: i32) -> (i32, i32) {
    %c0_i32 = arith.constant 0 : i32
    %c0_i32_0 = arith.constant 0 : i32
    %c0_i32_1 = arith.constant 0 : i32
    return %c0_i32, %c0_i32_0 : i32, i32
  }
  func.func @transform_5(%arg0: i32, %arg1: i32) -> (i32, i32) {
    %c0_i32 = arith.constant 0 : i32
    %c0_i32_0 = arith.constant 0 : i32
    %c0_i32_1 = arith.constant 0 : i32
    return %c0_i32, %c0_i32_0 : i32, i32
  }
  func.func @transform_6(%arg0: i32, %arg1: i32) -> (i32, i32) {
    %c0_i32 = arith.constant 0 : i32
    %c0_i32_0 = arith.constant 0 : i32
    %c0_i32_1 = arith.constant 0 : i32
    return %c0_i32, %c0_i32_0 : i32, i32
  }
  func.func @transform_7(%arg0: i32, %arg1: i32) -> (i32, i32) {
    %c0_i32 = arith.constant 0 : i32
    %c0_i32_0 = arith.constant 0 : i32
    return %arg0, %c0_i32 : i32, i32
  }
}

</mosaic_0001>

<llo_original>
// kernel: tpu_custom_call.1
$region0: #{tpu_custom_call.1}
  #allocation0 [shape = 'u32[]', space=smem, size = 0x4, offset = 0x4, fixed_abs, tag = 'smem constant byte address 0x4 - core index']
  #allocation1 [shape = 'u32[144,128]{1,0:T(1,128)}', space=vmem, size = 0x12000, scoped, tag = 'internal scratch']
  #allocation2 [shape = 'f32[2,32]{1,0:T(2,128)}', space=vmem, size = 0x400, scoped, tag = 'scratch operand']
  #allocation3 [shape = 'f32[1,1]{1,0:T(1,128)S(1)}', space=vmem, size = 0x200, scoped, tag = 'scoped memory for tpu_custom_call.1']
  %s0 = inlined_call_operand.vmem [shape: bf16[2,32], index: 0, kind: input, shape index: {}]
  %s1 = inlined_call_operand.hbm [shape: bf16[32,32], index: 1, kind: input, shape index: {}]
  %s2 = inlined_call_operand.vmem [shape: f32[1,32], index: 2, kind: input, shape index: {}]
  %s3 = inlined_call_operand.hbm [shape: bf16[32,32], index: 3, kind: input, shape index: {}]
  %s4 = inlined_call_operand.vmem [shape: f32[1,32], index: 4, kind: input, shape index: {}]
  %s5 = inlined_call_operand.vmem [shape: f32[1,32], index: 5, kind: input, shape index: {}]
  %s6 = inlined_call_operand.<no memory space> [shape: f32[1,1], index: 6, kind: input, shape index: {}]
  %s7 = inlined_call_operand.vmem [shape: f32[2,1], index: 7, kind: output, shape index: {}]
  %s8 = sld [smem:[#allocation0]]
  $region54: #{tpu_custom_call.1} parent=0
    _
  %s10 = ssub.s32 1, %s8
  %s11 = scalar_select 0, %s10, %s8
  %v12 = vstv %s6
  %13 = vst [vmem:[#allocation3] sm:$0x1] %v12
  $region1: #{tpu_custom_call.1} parent=0
    #allocation4 [shape = 'u8[8192]{0}', space=vmem, size = 0x2000, scoped, tag = 'input window, operand 1, single buffered']
    #allocation5 [shape = 's32[1]{0}', space=sflag, size = 0x4, scoped, tag = 'scoped memory for tpu_custom_call.1']
    #allocation6 [shape = 'u8[8192]{0}', space=vmem, size = 0x2000, scoped, tag = 'input window, operand 3, single buffered']
    #allocation7 [shape = 's32[1]{0}', space=sflag, size = 0x4, scoped, tag = 'scoped memory for tpu_custom_call.1']
    %14 = vsyncpa [#allocation5], 0
    %15 = vsyncpa [#allocation7], 0
    // Predicated region
    $region2: #{tpu_custom_call.1} parent=1 // pred_check
      _
    $region3: #{tpu_custom_call.1} parent=1 // pred_check_branch
      %17 = sbr.rel (0) target = $region5
    $region4: #{tpu_custom_call.1} parent=1 // pred_region
      _
    $region5: #{tpu_custom_call.1} parent=1 // pred_fallthru
      _
    // Predicated region
    $region6: #{tpu_custom_call.1} parent=1 // pred_check
      _
    $region7: #{tpu_custom_call.1} parent=1 // pred_check_branch
      %19 = sbr.rel (0) target = $region9
    $region8: #{tpu_custom_call.1} parent=1 // pred_region
      %s21 = ssub.s32 256, 256
      %22 = vsyncadd [#allocation5], %s21
      %s23 = sshll.u32 [#allocation4], 4
      %s24 = int_to_ptr.vmem [resolvable:$true] %s23
      %29 = dma.hbm_to_vmem [thread:$0]  %s1, 256, %s24, [#allocation5], 64, 64, 4
    $region9: #{tpu_custom_call.1} parent=1 // pred_fallthru
      _
    // Predicated region
    $region10: #{tpu_custom_call.1} parent=1 // pred_check
      _
    $region11: #{tpu_custom_call.1} parent=1 // pred_check_branch
      %31 = sbr.rel (0) target = $region13
    $region12: #{tpu_custom_call.1} parent=1 // pred_region
      _
    $region13: #{tpu_custom_call.1} parent=1 // pred_fallthru
      _
    // Predicated region
    $region14: #{tpu_custom_call.1} parent=1 // pred_check
      _
    $region15: #{tpu_custom_call.1} parent=1 // pred_check_branch
      %33 = sbr.rel (0) target = $region17
    $region16: #{tpu_custom_call.1} parent=1 // pred_region
      %s35 = ssub.s32 256, 256
      %36 = vsyncadd [#allocation7], %s35
      %s37 = sshll.u32 [#allocation6], 4
      %s38 = int_to_ptr.vmem [resolvable:$true] %s37
      %43 = dma.hbm_to_vmem [thread:$0]  %s3, 256, %s38, [#allocation7], 64, 64, 4
    $region17: #{tpu_custom_call.1} parent=1 // pred_fallthru
      _
    // Predicated region
    $region18: #{tpu_custom_call.1} parent=1 // pred_check
      _
    $region19: #{tpu_custom_call.1} parent=1 // pred_check_branch
      %45 = sbr.rel (0) target = $region21
    $region20: #{tpu_custom_call.1} parent=1 // pred_region
      _
    $region21: #{tpu_custom_call.1} parent=1 // pred_fallthru
      _
    // Predicated region
    $region22: #{tpu_custom_call.1} parent=1 // pred_check
      _
    $region23: #{tpu_custom_call.1} parent=1 // pred_check_branch
      %47 = sbr.rel (0) target = $region25
    $region24: #{tpu_custom_call.1} parent=1 // pred_region
      _
    $region25: #{tpu_custom_call.1} parent=1 // pred_fallthru
      _
    // Predicated region
    $region26: #{tpu_custom_call.1} parent=1 // pred_check
      _
    $region27: #{tpu_custom_call.1} parent=1 // pred_check_branch
      %49 = sbr.rel (0) target = $region29
    $region28: #{tpu_custom_call.1} parent=1 // pred_region
      _
    $region29: #{tpu_custom_call.1} parent=1 // pred_fallthru
      _
    // Predicated region
    $region30: #{tpu_custom_call.1} parent=1 // pred_check
      _
    $region31: #{tpu_custom_call.1} parent=1 // pred_check_branch
      %51 = sbr.rel (0) target = $region33
    $region32: #{tpu_custom_call.1} parent=1 // pred_region
      %52 = dma.done [#allocation5], 256
    $region33: #{tpu_custom_call.1} parent=1 // pred_fallthru
      _
    // Predicated region
    $region34: #{tpu_custom_call.1} parent=1 // pred_check
      _
    $region35: #{tpu_custom_call.1} parent=1 // pred_check_branch
      %54 = sbr.rel (0) target = $region37
    $region36: #{tpu_custom_call.1} parent=1 // pred_region
      %55 = dma.done [#allocation7], 256
    $region37: #{tpu_custom_call.1} parent=1 // pred_fallthru
      _
    %p57 = scmp.eq.s32.totalorder 0, 0
    // Predicated region
    $region38: #{tpu_custom_call.1} parent=1 // pred_check
      %p58 = pneg %p57
    $region39: #{tpu_custom_call.1} parent=1 // pred_check_branch
      %60 = sbr.rel (%p58) target = $region41
    $region40: #{tpu_custom_call.1} parent=1 // pred_region
      %vm61 = vcmask 254976
      %62 = vst.msk [vmem:[#allocation2] sm:$0x3] %vm61, 0.0
    $region41: #{tpu_custom_call.1} parent=1 // pred_fallthru
      _
    %v63 = vld [vmem:[%s0] sm:$0x1]
    %v64 = vld [vmem:[#allocation4] sm:$0xf]
    %v65 = vld [vmem:[#allocation4 + $0x4] sm:$0xf]
    %v66 = vld [vmem:[#allocation4 + $0x8] sm:$0xf]
    %v67 = vld [vmem:[#allocation4 + $0xc] sm:$0xf]
    %v68 = vld [vmem:[%s2] sm:$0x1]
    %v70 = vlaneseq
    %v71 = vshrl.u32 %v70, 7
    %v72 = vsub.s32 0, %v71
    %v73 = vrot.slane %v68, %v72
    %v79 = vunpack.c.l.b16 %v64
    %v80 = vunpack.c.l.b16 %v65
    %v81 = vunpack.c.l.b16 %v66
    %v82 = vunpack.c.l.b16 %v67
    %v83 = vpack.c.b16 %v80, %v79
    %v84 = vpack.c.b16 %v82, %v81
    %vm87 = vcmask 261120
    %v89 = vsel %vm87, %v63, 0
    %91 = vmatprep.subr.bf16.mxu0 0
    %92 = vmatpush1.bf16.msra.mxu0 %v83
    %93 = vmatprep.subr.bf16.mxu0 0
    %94 = vmatpush1.bf16.msra.mxu0 %v84
    %95 = vmatprep.subr.bf16.mxu0 0
    %96 = vmatpush1.bf16.msra.mxu0 0
    %97 = vmatprep.subr.bf16.mxu0 0
    %98 = vmatpush1.bf16.msra.mxu0 0
    %99 = vmatprep.subr.bf16.mxu0 0
    %100 = vmatpush1.bf16.msra.mxu0 0
    %101 = vmatprep.subr.bf16.mxu0 0
    %102 = vmatpush1.bf16.msra.mxu0 0
    %103 = vmatprep.subr.bf16.mxu0 0
    %104 = vmatpush1.bf16.msra.mxu0 0
    %105 = vmatprep.subr.bf16.mxu0 0
    %106 = vmatpush1.bf16.msra.mxu0 0
    %107 = vmatprep.subr.bf16.mxu0 0
    %108 = vmatpush1.bf16.msra.mxu0 0
    %109 = vmatprep.subr.bf16.mxu0 0
    %110 = vmatpush1.bf16.msra.mxu0 0
    %111 = vmatprep.subr.bf16.mxu0 0
    %112 = vmatpush1.bf16.msra.mxu0 0
    %113 = vmatprep.subr.bf16.mxu0 0
    %114 = vmatpush1.bf16.msra.mxu0 0
    %115 = vmatprep.subr.bf16.mxu0 0
    %116 = vmatpush1.bf16.msra.mxu0 0
    %117 = vmatprep.subr.bf16.mxu0 0
    %118 = vmatpush1.bf16.msra.mxu0 0
    %119 = vmatprep.subr.bf16.mxu0 0
    %120 = vmatpush1.bf16.msra.mxu0 0
    %121 = vmatprep.subr.bf16.mxu0 0
    %122 = vmatpush1.bf16.msra.mxu0 0
    %123 = vmatprep.mubr.bf16.mxu0 0
    %124 = vmatmul.mubr.bf16.gmra.mrb[0].mxu0 %v89
    %v125 = vpop.f32.mrb[0].mxu0
    %v126 = vadd.f32 %v73, %v125
    %v127 = vpop.f32.mrb[0].mxu0
    %v128 = vpop.f32.mrb[0].mxu0
    %v129 = vpop.f32.mrb[0].mxu0
    %130 = vdwg.mxu0
    %v131 = vld [vmem:[#allocation2] sm:$0x3]
    %v132 = vpack.c.bf16 %v126, %v126
    %v133 = vld [vmem:[#allocation6] sm:$0xf]
    %v134 = vld [vmem:[#allocation6 + $0x4] sm:$0xf]
    %v135 = vld [vmem:[#allocation6 + $0x8] sm:$0xf]
    %v136 = vld [vmem:[#allocation6 + $0xc] sm:$0xf]
    %v141 = vunpack.c.l.b16 %v133
    %v142 = vunpack.c.l.b16 %v134
    %v143 = vunpack.c.l.b16 %v135
    %v144 = vunpack.c.l.b16 %v136
    %v145 = vpack.c.b16 %v142, %v141
    %v146 = vpack.c.b16 %v144, %v143
    %v150 = vsel %vm87, %v132, 0
    %152 = vmatprep.subr.bf16.mxu0 0
    %153 = vmatpush1.bf16.msra.mxu0 %v145
    %154 = vmatprep.subr.bf16.mxu0 0
    %155 = vmatpush1.bf16.msra.mxu0 %v146
    %156 = vmatprep.subr.bf16.mxu0 0
    %157 = vmatpush1.bf16.msra.mxu0 0
    %158 = vmatprep.subr.bf16.mxu0 0
    %159 = vmatpush1.bf16.msra.mxu0 0
    %160 = vmatprep.subr.bf16.mxu0 0
    %161 = vmatpush1.bf16.msra.mxu0 0
    %162 = vmatprep.subr.bf16.mxu0 0
    %163 = vmatpush1.bf16.msra.mxu0 0
    %164 = vmatprep.subr.bf16.mxu0 0
    %165 = vmatpush1.bf16.msra.mxu0 0
    %166 = vmatprep.subr.bf16.mxu0 0
    %167 = vmatpush1.bf16.msra.mxu0 0
    %168 = vmatprep.subr.bf16.mxu0 0
    %169 = vmatpush1.bf16.msra.mxu0 0
    %170 = vmatprep.subr.bf16.mxu0 0
    %171 = vmatpush1.bf16.msra.mxu0 0
    %172 = vmatprep.subr.bf16.mxu0 0
    %173 = vmatpush1.bf16.msra.mxu0 0
    %174 = vmatprep.subr.bf16.mxu0 0
    %175 = vmatpush1.bf16.msra.mxu0 0
    %176 = vmatprep.subr.bf16.mxu0 0
    %177 = vmatpush1.bf16.msra.mxu0 0
    %178 = vmatprep.subr.bf16.mxu0 0
    %179 = vmatpush1.bf16.msra.mxu0 0
    %180 = vmatprep.subr.bf16.mxu0 0
    %181 = vmatpush1.bf16.msra.mxu0 0
    %182 = vmatprep.subr.bf16.mxu0 0
    %183 = vmatpush1.bf16.msra.mxu0 0
    %184 = vmatprep.mubr.bf16.mxu0 0
    %185 = vmatmul.mubr.bf16.gmra.mrb[0].mxu0 %v150
    %v186 = vpop.f32.mrb[0].mxu0
    %v187 = vadd.f32 0.0, %v186
    %v188 = vpop.f32.mrb[0].mxu0
    %v189 = vpop.f32.mrb[0].mxu0
    %v190 = vpop.f32.mrb[0].mxu0
    %191 = vdwg.mxu0
    %v192 = vadd.f32 %v131, %v187
    %vm193 = vcmask 254976
    %194 = vst.msk [vmem:[#allocation2] sm:$0x3] %vm193, %v192
    // Predicated region
    $region42: #{tpu_custom_call.1} parent=1 // pred_check
      %p195 = pneg %p57
    $region43: #{tpu_custom_call.1} parent=1 // pred_check_branch
      %197 = sbr.rel (%p195) target = $region45
    $region44: #{tpu_custom_call.1} parent=1 // pred_region
      %v198 = vld [vmem:[#allocation2] sm:$0x3]
      %v199 = vld [vmem:[%s4] sm:$0x1]
      %v201 = vlaneseq
      %v202 = vshrl.u32 %v201, 7
      %v203 = vsub.s32 0, %v202
      %v204 = vrot.slane %v199, %v203
      %v206 = vadd.f32 %v198, %v204
      %v207 = vld [vmem:[%s5] sm:$0x1]
      %v209 = vlaneseq
      %v210 = vshrl.u32 %v209, 7
      %v211 = vsub.s32 0, %v210
      %v212 = vrot.slane %v207, %v211
      %v214 = vmul.f32 %v206, %v212
      %v215 = vsel %vm193, %v214, 0.0
      %216 = vadd.xlane.f32.xlu0 %v215
      %v217 = vpop.xlane.xlu0 %216
      %v218 = vld [vmem:[#allocation3] sm:$0x1]
      %v220 = vlaneseq
      %v221 = vshrl.u32 %v220, 7
      %v222 = vsub.s32 0, %v221
      %v223 = vrot.slane %v218, %v222
      %v225 = vadd.f32 %v217, %v223
      %vm226 = vcmask 1024
      %227 = vst.msk [vmem:[%s7] sm:$0x3] %vm226, %v225
    $region45: #{tpu_custom_call.1} parent=1 // pred_fallthru
      _
    // Predicated region
    $region46: #{tpu_custom_call.1} parent=1 // pred_check
      _
    $region47: #{tpu_custom_call.1} parent=1 // pred_check_branch
      %229 = sbr.rel (0) target = $region49
    $region48: #{tpu_custom_call.1} parent=1 // pred_region
      _
    $region49: #{tpu_custom_call.1} parent=1 // pred_fallthru
      _
    // Predicated region
    $region50: #{tpu_custom_call.1} parent=1 // pred_check
      _
    $region51: #{tpu_custom_call.1} parent=1 // pred_check_branch
      %231 = sbr.rel (0) target = $region53
    $region52: #{tpu_custom_call.1} parent=1 // pred_region
      _
    $region53: #{tpu_custom_call.1} parent=1 // pred_fallthru
      _
    %232 = vsyncpa [#allocation5], 1
    %233 = vsyncpa [#allocation7], 1

</llo_original>
